<compile_context>
chip_gen: v6e
topology: v6e:2x2x1
jax: 0.10.0
libtpu: 0.0.40
codegen_flags: <defaults>
</compile_context>

<pallas_src>
import functools
import math

import jax
import jax.numpy as jnp
from jax import lax
from jax.experimental import pallas as pl
from jax.experimental.pallas import tpu as pltpu

_LN2 = math.log(2.0)
_LANE = 128
# ~512 KiB f32 per input block -> ~1 MiB double-buffered per input: near the
# HBM roofline yet comfortably inside v5e's 16 MiB default scoped VMEM even
# with several inputs in flight.  Must stay a multiple of 32 sublanes.
_MAX_BLOCK_ROWS = 1024


def _cdiv(a, b):
    return -(-a // b)


def _pick_block_rows(rows, max_rows):
    # Full-dim blocks are always legal (even when rows % 8 != 0); otherwise
    # cap at max_rows (a multiple of the sublane quantum).
    return rows if rows <= max_rows else max_rows


def _as_2d(x):
    """View x as (rows, lanes) without copying.

    Lane-dense (rows, 128) whenever the element count allows it; otherwise
    fall back to (prod(leading dims), last_dim).
    """
    n = x.size
    if n % _LANE == 0:
        return x.reshape(n // _LANE, _LANE)
    return x.reshape(-1, x.shape[-1])


# ---------------------------------------------------------------------------
# Kernel 1: fused sum(log(x)) over all likelihood tensors (bpp reduction).
# ---------------------------------------------------------------------------
def _log_sum_block(x_ref, out_ref, g, toff, blk_rows, rows):
    """Write sum(log(x)) of the currently mapped block of one tensor."""
    blk = g - toff
    row_ids = lax.broadcasted_iota(jnp.int32, x_ref.shape, 0)
    valid = (blk * blk_rows + row_ids) < rows          # mask tail-block padding
    x = jnp.where(valid, x_ref[...].astype(jnp.float32), 1.0)   # log(1) == 0
    out_ref[...] = jnp.sum(jnp.log(x)).reshape(1, 1, 1)


def neg_log2_total(likelihoods, max_block_rows=_MAX_BLOCK_ROWS):
    """sum over all tensors of -log2(x), in a single fused pallas_call."""
    xs = [_as_2d(x) for x in likelihoods]
    if not xs:
        return jnp.float32(0.0)

    metas = []                      # (block_offset, nblk, blk_rows, rows)
    off = 0
    for x in xs:
        rows = x.shape[0]
        blk_rows = _pick_block_rows(rows, max_block_rows)
        nblk = _cdiv(rows, blk_rows)
        metas.append((off, nblk, blk_rows, rows))
        off += nblk
    total_blocks = off

    def kernel(*refs):
        out_ref = refs[-1]
        g = pl.program_id(0)
        for t, (toff, nblk, blk_rows, rows) in enumerate(metas):
            pl.when((g >= toff) & (g < toff + nblk))(
                functools.partial(_log_sum_block, refs[t], out_ref, g,
                                  toff, blk_rows, rows))

    def _make_imap(toff, nblk):
        def imap(g):
            # Outside this tensor's block range the index clamps to a constant,
            # so the pipeline elides the (unused) re-fetch.
            return (jnp.clip(g - toff, 0, nblk - 1), 0)
        return imap

    in_specs = [
        pl.BlockSpec((blk_rows, x.shape[1]), _make_imap(toff, nblk))
        for x, (toff, nblk, blk_rows, _) in zip(xs, metas)
    ]

    partials = pl.pallas_call(
        kernel,
        out_shape=jax.ShapeDtypeStruct((total_blocks, 1, 1), jnp.float32),
        grid=(total_blocks,),
        in_specs=in_specs,
        out_specs=pl.BlockSpec((1, 1, 1), lambda g: (g, 0, 0)),
        compiler_params=pltpu.CompilerParams(
            dimension_semantics=("parallel",)),
    )(*xs)
    # sum(log(x)) over everything  ->  sum(-log2(x))
    return -jnp.sum(partials) / _LN2


# ---------------------------------------------------------------------------
# Kernel 2: per-batch sum((x_hat - target)^2), chunked along C*H*W.
# ---------------------------------------------------------------------------
def batched_sq_err_sums(x_hat, target, max_block_rows=_MAX_BLOCK_ROWS):
    """Per-batch-element sum((x_hat - target) ** 2), returned as shape (N,)."""
    N = target.shape[0]
    per = target.size // N
    if per % _LANE == 0:
        shp = (N, per // _LANE, _LANE)                      # lane-dense
    else:
        shp = (N, per // target.shape[-1], target.shape[-1])
    xh = x_hat.reshape(shp)          # reshape only; native dtype, no HBM copy
    tg = target.reshape(shp)
    _, R, L = shp
    blk_rows = _pick_block_rows(R, max_block_rows)
    nchunks = _cdiv(R, blk_rows)

    def kernel(x_ref, t_ref, out_ref):
        c = pl.program_id(1)
        d = x_ref[...].astype(jnp.float32) - t_ref[...].astype(jnp.float32)
        row_ids = lax.broadcasted_iota(jnp.int32, d.shape, 1)
        d = jnp.where((c * blk_rows + row_ids) < R, d, 0.0)  # mask tail block
        out_ref[...] = jnp.sum(d * d).reshape(1, 1, 1, 1)

    partials = pl.pallas_call(
        kernel,
        out_shape=jax.ShapeDtypeStruct((N, nchunks, 1, 1), jnp.float32),
        grid=(N, nchunks),
        in_specs=[
            pl.BlockSpec((1, blk_rows, L), lambda b, c: (b, c, 0)),
            pl.BlockSpec((1, blk_rows, L), lambda b, c: (b, c, 0)),
        ],
        out_specs=pl.BlockSpec((1, 1, 1, 1), lambda b, c: (b, c, 0, 0)),
        compiler_params=pltpu.CompilerParams(
            dimension_semantics=("parallel", "parallel")),
    )(xh, tg)
    return jnp.sum(partials, axis=(1, 2, 3))


# ---------------------------------------------------------------------------
# Module forward (hot reductions in Pallas, tiny glue in plain JAX).
# ---------------------------------------------------------------------------
def pixelwise_rate_distortion_loss(output, target, lmbdalevel,
                                   max_block_rows=_MAX_BLOCK_ROWS):
    N, _, H, W = target.shape
    num_pixels = N * H * W

    bpp_loss = neg_log2_total(list(output["likelihoods"].values()),
                              max_block_rows) / num_pixels

    sq = batched_sq_err_sums(output["x_hat"], target, max_block_rows)   # (N,)
    lam = jnp.asarray(lmbdalevel).reshape(-1).astype(jnp.float32)
    if lam.size == 1:
        lam = jnp.broadcast_to(lam, (N,))
    elif lam.size != N:
        # lmbdalevel.expand_as(mse) is only supported for per-batch scalars.
        raise ValueError(
            "lmbdalevel must be a scalar or one scalar per batch element; "
            f"got shape {jnp.shape(lmbdalevel)}")
    mse_loss = jnp.sum(lam * sq) / target.size
    loss = 255 ** 2 * mse_loss * 1.2 + bpp_loss
    return {"bpp_loss": bpp_loss, "mse_loss": mse_loss, "loss": loss}


# ---------------------------------------------------------------------------
# Pure-JAX reference for correctness checking.
# ---------------------------------------------------------------------------
def _reference(output, target, lmbdalevel):
    N, _, H, W = target.shape
    num_pixels = N * H * W
    bpp = sum((-jnp.log2(lk)).sum() / num_pixels
              for lk in output["likelihoods"].values())
    mse = (output["x_hat"] - target) ** 2
    lam = jnp.broadcast_to(lmbdalevel, mse.shape)
    mse_loss = jnp.mean(lam * mse)
    loss = 255 ** 2 * mse_loss * 1.2 + bpp
    return {"bpp_loss": bpp, "mse_loss": mse_loss, "loss": loss}


if __name__ == "__main__":
    key = jax.random.PRNGKey(0)
    k1, k2, k3, k4, k5, k6 = jax.random.split(key, 6)

    N, C, H, W = 2, 5, 16, 16
    target = jax.random.normal(k1, (N, C, H, W), jnp.float32)
    x_hat = target + 0.1 * jax.random.normal(k2, (N, C, H, W), jnp.float32)

    # likelihoods strictly in (0, 1]; shapes chosen to exercise the lane-dense
    # path (y, h) and the ragged fallback path (z).
    lk_y = jax.random.uniform(k3, (N, 8, 4, 4), jnp.float32, 1e-3, 1.0)
    lk_z = jax.random.uniform(k4, (N, 4, 2, 2), jnp.float32, 1e-3, 1.0)
    lk_h = jax.random.uniform(k6, (N, 5, 8, 16), jnp.float32, 1e-3, 1.0)

    # per-batch lambda, broadcastable to mse shape (N, 1, 1, 1)
    lmbdalevel = jax.random.uniform(k5, (N, 1, 1, 1), jnp.float32, 0.005, 0.05)

    output = {"x_hat": x_hat, "likelihoods": {"y": lk_y, "z": lk_z, "h": lk_h}}
    ref = _reference(output, target, lmbdalevel)

    # 1) production block size
    out = pixelwise_rate_distortion_loss(output, target, lmbdalevel)
    out = {k: jax.block_until_ready(v) for k, v in out.items()}
    for k in ("bpp_loss", "mse_loss", "loss"):
        assert jnp.allclose(out[k], ref[k], rtol=1e-5, atol=1e-6), (
            k, out[k], ref[k])

    # 2) tiny block cap: forces multi-block grids, clamped index maps and
    #    tail-block masking on the same small inputs.
    out_small = pixelwise_rate_distortion_loss(output, target, lmbdalevel,
                                               max_block_rows=8)
    out_small = {k: jax.block_until_ready(v) for k, v in out_small.items()}
    for k in ("bpp_loss", "mse_loss", "loss"):
        assert jnp.allclose(out_small[k], ref[k], rtol=1e-5, atol=1e-6), (
            k, out_small[k], ref[k])

    print("KERNEL_OK")
</pallas_src>

<mosaic_0001>
module attributes {stable_mosaic.version = 11 : i64} {
  func.func @kernel(%arg0: i32, %arg1: memref<2x128xf32, #tpu.memory_space<vmem>>, %arg2: memref<16x2xf32, #tpu.memory_space<vmem>>, %arg3: memref<10x128xf32, #tpu.memory_space<vmem>>, %arg4: memref<1x1x1xf32, #tpu.memory_space<vmem>>) attributes {dimension_semantics = [#tpu.dimension_semantics<parallel>], iteration_bounds = array<i64: 3>, scalar_prefetch = 0 : i64, scratch_operands = 0 : i64, tpu.core_type = #tpu.core_type<tc>, window_params = [{transform_indices = @transform_0, window_bounds = array<i64: 2, 128>}, {transform_indices = @transform_1, window_bounds = array<i64: 16, 2>}, {transform_indices = @transform_2, window_bounds = array<i64: 10, 128>}, {transform_indices = @transform_3, window_bounds = array<i64: 1, 1, 1>}]} {
    %c0_i32 = arith.constant 0 : i32
    %0 = arith.cmpi sge, %arg0, %c0_i32 : i32
    %c1_i32 = arith.constant 1 : i32
    %1 = arith.cmpi slt, %arg0, %c1_i32 : i32
    %2 = arith.andi %0, %1 : i1
    %3 = arith.extui %2 : i1 to i32
    %c0_i32_0 = arith.constant 0 : i32
    %4 = arith.cmpi ne, %3, %c0_i32_0 : i32
    scf.if %4 {
      %c0_i32_5 = arith.constant 0 : i32
      %15 = arith.subi %arg0, %c0_i32_5 : i32
      %16 = tpu.iota {dimensions = array<i32: 0>} : vector<2x128xi32>
      %c2_i32_6 = arith.constant 2 : i32
      %17 = arith.muli %15, %c2_i32_6 : i32
      %18 = vector.broadcast %17 : i32 to vector<2x128xi32>
      %19 = arith.addi %18, %16 : vector<2x128xi32>
      %c2_i32_7 = arith.constant 2 : i32
      %20 = vector.broadcast %c2_i32_7 : i32 to vector<2x128xi32>
      %21 = arith.cmpi slt, %19, %20 : vector<2x128xi32>
      %c0 = arith.constant 0 : index
      %c0_8 = arith.constant 0 : index
      %22 = vector.load %arg1[%c0, %c0_8] : memref<2x128xf32, #tpu.memory_space<vmem>>, vector<2x128xf32>
      %cst = arith.constant 1.000000e+00 : f32
      %23 = vector.broadcast %cst : f32 to vector<2x128xf32>
      %24 = arith.select %21, %22, %23 : vector<2x128xi1>, vector<2x128xf32>
      %25 = math.log %24 : vector<2x128xf32>
      %26 = vector.shape_cast %25 : vector<2x128xf32> to vector<1x2x128xf32>
      %cst_9 = arith.constant dense<0.000000e+00> : vector<1xf32>
      %27 = vector.multi_reduction <add>, %26, %cst_9 [1, 2] : vector<1x2x128xf32> to vector<1xf32>
      %28 = vector.shape_cast %27 : vector<1xf32> to vector<1x1x1xf32>
      %29 = vector.extract %28[0, 0, 0] : f32 from vector<1x1x1xf32>
      %30 = vector.broadcast %29 : f32 to vector<1x1x1xf32>
      %c0_10 = arith.constant 0 : index
      %c0_11 = arith.constant 0 : index
      %c0_12 = arith.constant 0 : index
      %31 = vector.load %arg4[%c0_10, %c0_11, %c0_12] : memref<1x1x1xf32, #tpu.memory_space<vmem>>, vector<1x1x1xf32>
      tpu.vector_store %arg4[%c0_10, %c0_11, %c0_12], %30 {strides = array<i32>} : memref<1x1x1xf32, #tpu.memory_space<vmem>>, vector<1x1x1xf32>,
    } else {
    }
    %c1_i32_1 = arith.constant 1 : i32
    %5 = arith.cmpi sge, %arg0, %c1_i32_1 : i32
    %c2_i32 = arith.constant 2 : i32
    %6 = arith.cmpi slt, %arg0, %c2_i32 : i32
    %7 = arith.andi %5, %6 : i1
    %8 = arith.extui %7 : i1 to i32
    %c0_i32_2 = arith.constant 0 : i32
    %9 = arith.cmpi ne, %8, %c0_i32_2 : i32
    scf.if %9 {
      %c1_i32_5 = arith.constant 1 : i32
      %15 = arith.subi %arg0, %c1_i32_5 : i32
      %16 = tpu.iota {dimensions = array<i32: 0>} : vector<16x2xi32>
      %c16_i32 = arith.constant 16 : i32
      %17 = arith.muli %15, %c16_i32 : i32
      %18 = vector.broadcast %17 : i32 to vector<16x2xi32>
      %19 = arith.addi %18, %16 : vector<16x2xi32>
      %c16_i32_6 = arith.constant 16 : i32
      %20 = vector.broadcast %c16_i32_6 : i32 to vector<16x2xi32>
      %21 = arith.cmpi slt, %19, %20 : vector<16x2xi32>
      %c0 = arith.constant 0 : index
      %c0_7 = arith.constant 0 : index
      %22 = vector.load %arg2[%c0, %c0_7] : memref<16x2xf32, #tpu.memory_space<vmem>>, vector<16x2xf32>
      %cst = arith.constant 1.000000e+00 : f32
      %23 = vector.broadcast %cst : f32 to vector<16x2xf32>
      %24 = arith.select %21, %22, %23 : vector<16x2xi1>, vector<16x2xf32>
      %25 = math.log %24 : vector<16x2xf32>
      %26 = vector.shape_cast %25 : vector<16x2xf32> to vector<1x16x2xf32>
      %cst_8 = arith.constant dense<0.000000e+00> : vector<1xf32>
      %27 = vector.multi_reduction <add>, %26, %cst_8 [1, 2] : vector<1x16x2xf32> to vector<1xf32>
      %28 = vector.shape_cast %27 : vector<1xf32> to vector<1x1x1xf32>
      %29 = vector.extract %28[0, 0, 0] : f32 from vector<1x1x1xf32>
      %30 = vector.broadcast %29 : f32 to vector<1x1x1xf32>
      %c0_9 = arith.constant 0 : index
      %c0_10 = arith.constant 0 : index
      %c0_11 = arith.constant 0 : index
      %31 = vector.load %arg4[%c0_9, %c0_10, %c0_11] : memref<1x1x1xf32, #tpu.memory_space<vmem>>, vector<1x1x1xf32>
      tpu.vector_store %arg4[%c0_9, %c0_10, %c0_11], %30 {strides = array<i32>} : memref<1x1x1xf32, #tpu.memory_space<vmem>>, vector<1x1x1xf32>,
    } else {
    }
    %c2_i32_3 = arith.constant 2 : i32
    %10 = arith.cmpi sge, %arg0, %c2_i32_3 : i32
    %c3_i32 = arith.constant 3 : i32
    %11 = arith.cmpi slt, %arg0, %c3_i32 : i32
    %12 = arith.andi %10, %11 : i1
    %13 = arith.extui %12 : i1 to i32
    %c0_i32_4 = arith.constant 0 : i32
    %14 = arith.cmpi ne, %13, %c0_i32_4 : i32
    scf.if %14 {
      %c2_i32_5 = arith.constant 2 : i32
      %15 = arith.subi %arg0, %c2_i32_5 : i32
      %16 = tpu.iota {dimensions = array<i32: 0>} : vector<10x128xi32>
      %c10_i32 = arith.constant 10 : i32
      %17 = arith.muli %15, %c10_i32 : i32
      %18 = vector.broadcast %17 : i32 to vector<10x128xi32>
      %19 = arith.addi %18, %16 : vector<10x128xi32>
      %c10_i32_6 = arith.constant 10 : i32
      %20 = vector.broadcast %c10_i32_6 : i32 to vector<10x128xi32>
      %21 = arith.cmpi slt, %19, %20 : vector<10x128xi32>
      %c0 = arith.constant 0 : index
      %c0_7 = arith.constant 0 : index
      %22 = vector.load %arg3[%c0, %c0_7] : memref<10x128xf32, #tpu.memory_space<vmem>>, vector<10x128xf32>
      %cst = arith.constant 1.000000e+00 : f32
      %23 = vector.broadcast %cst : f32 to vector<10x128xf32>
      %24 = arith.select %21, %22, %23 : vector<10x128xi1>, vector<10x128xf32>
      %25 = math.log %24 : vector<10x128xf32>
      %26 = vector.shape_cast %25 : vector<10x128xf32> to vector<1x10x128xf32>
      %cst_8 = arith.constant dense<0.000000e+00> : vector<1xf32>
      %27 = vector.multi_reduction <add>, %26, %cst_8 [1, 2] : vector<1x10x128xf32> to vector<1xf32>
      %28 = vector.shape_cast %27 : vector<1xf32> to vector<1x1x1xf32>
      %29 = vector.extract %28[0, 0, 0] : f32 from vector<1x1x1xf32>
      %30 = vector.broadcast %29 : f32 to vector<1x1x1xf32>
      %c0_9 = arith.constant 0 : index
      %c0_10 = arith.constant 0 : index
      %c0_11 = arith.constant 0 : index
      %31 = vector.load %arg4[%c0_9, %c0_10, %c0_11] : memref<1x1x1xf32, #tpu.memory_space<vmem>>, vector<1x1x1xf32>
      tpu.vector_store %arg4[%c0_9, %c0_10, %c0_11], %30 {strides = array<i32>} : memref<1x1x1xf32, #tpu.memory_space<vmem>>, vector<1x1x1xf32>,
    } else {
    }
    return
  }
  func.func @transform_0(%arg0: i32) -> (i32, i32) {
    %c0_i32 = arith.constant 0 : i32
    %0 = arith.subi %arg0, %c0_i32 : i32
    %c0_i32_0 = arith.constant 0 : i32
    %c0_i32_1 = arith.constant 0 : i32
    %1 = arith.maxsi %c0_i32_0, %0 : i32
    %2 = arith.minsi %c0_i32_1, %1 : i32
    %c0_i32_2 = arith.constant 0 : i32
    %c0_i32_3 = arith.constant 0 : i32
    return %2, %c0_i32_2 : i32, i32
  }
  func.func @transform_1(%arg0: i32) -> (i32, i32) {
    %c1_i32 = arith.constant 1 : i32
    %0 = arith.subi %arg0, %c1_i32 : i32
    %c0_i32 = arith.constant 0 : i32
    %c0_i32_0 = arith.constant 0 : i32
    %1 = arith.maxsi %c0_i32, %0 : i32
    %2 = arith.minsi %c0_i32_0, %1 : i32
    %c0_i32_1 = arith.constant 0 : i32
    %c0_i32_2 = arith.constant 0 : i32
    return %2, %c0_i32_1 : i32, i32
  }
  func.func @transform_2(%arg0: i32) -> (i32, i32) {
    %c2_i32 = arith.constant 2 : i32
    %0 = arith.subi %arg0, %c2_i32 : i32
    %c0_i32 = arith.constant 0 : i32
    %c0_i32_0 = arith.constant 0 : i32
    %1 = arith.maxsi %c0_i32, %0 : i32
    %2 = arith.minsi %c0_i32_0, %1 : i32
    %c0_i32_1 = arith.constant 0 : i32
    %c0_i32_2 = arith.constant 0 : i32
    return %2, %c0_i32_1 : i32, i32
  }
  func.func @transform_3(%arg0: i32) -> (i32, i32, i32) {
    %c0_i32 = arith.constant 0 : i32
    %c0_i32_0 = arith.constant 0 : i32
    %c0_i32_1 = arith.constant 0 : i32
    return %arg0, %c0_i32, %c0_i32_0 : i32, i32, i32
  }
}

</mosaic_0001>

<llo_original>
// kernel: tpu_custom_call.1
$region0: #{tpu_custom_call.1}
  #allocation0 [shape = 'u32[]', space=smem, size = 0x4, offset = 0x4, fixed_abs, tag = 'smem constant byte address 0x4 - core index']
  #allocation1 [shape = 'u32[144,128]{1,0:T(1,128)}', space=vmem, size = 0x12000, scoped, tag = 'internal scratch']
  %s0 = inlined_call_operand.vmem [shape: f32[2,128], index: 0, kind: input, shape index: {}]
  %s1 = inlined_call_operand.vmem [shape: f32[16,2], index: 1, kind: input, shape index: {}]
  %s2 = inlined_call_operand.vmem [shape: f32[10,128], index: 2, kind: input, shape index: {}]
  %s3 = inlined_call_operand.vmem [shape: f32[3,1,1], index: 3, kind: output, shape index: {}]
  %s4 = sld [smem:[#allocation0]]
  $region57: #{tpu_custom_call.1} parent=0
    _
  %s6 = ssub.s32 1, %s4
  %s7 = scalar_select 0, %s6, %s4
  loop: start=0, step=1, limit=5
  $region2: #{tpu_custom_call.1} parent=0 // loop_pre_header
    _
  $region3: #{tpu_custom_call.1} parent=0 // loop_header
    %s9 = sphi 0, %s13
    %p10 = scmp.ge.s32.totalorder %s9, 5
    %s27 = sphi 0, %s29
    %s30 = sphi 0, %s27
    %s31 = sphi 0, %s30
    %s47 = sphi 0, %s31
    %s63 = sphi 0, %s65
    %s66 = sphi 0, %s63
    %s67 = sphi 0, %s66
    %s83 = sphi 0, %s67
    %s99 = sphi 0, %s101
    %s102 = sphi 0, %s99
    %s103 = sphi 0, %s102
    %s119 = sphi 0, %s103
    %s125 = sphi 0, %s127
    %s128 = sphi 0, %s125
    %s129 = sphi 0, %s128
    %s145 = sphi 0, %s129
  $region4: #{tpu_custom_call.1} parent=0 // loop_header_branch
    %12 = sbr.rel (%p10) target = $region8
  $region5: #{tpu_custom_call.1} parent=0 // loop_body
    %s14 = ssub.s32 %s9, 1
    %s15 = ssub.s32 %s9, 2
    %s16 = sadd.s32 %s9, 1
    %p17 = scmp.gt.s32.totalorder %s9, 0
    %s18 = scalar_select %p17, %s9, 0
    %p19 = scmp.lt.s32.totalorder %s18, 0
    %s20 = scalar_select %p19, %s18, 0
    %p21 = scmp.gt.s32.totalorder %s16, 0
    %s22 = scalar_select %p21, %s16, 0
    %p23 = scmp.lt.s32.totalorder %s22, 0
    %s24 = scalar_select %p23, %s22, 0
    %s25 = ssub.s32 %s20, %s24
    %p26 = scmp.eq.s32.totalorder %s25, 0
    %s28 = sadd.s32 %s27, 1
    %s29 = scalar_select %p26, %s27, %s28
    %p32 = pneg %p26
    %p33 = scmp.eq.s32.totalorder %s9, 2
    %p34 = por %p32, %p33
    %p35 = scmp.ne.s32.totalorder %s27, %s30
    %p36 = scmp.eq.s32.totalorder %s9, 0
    %p37 = por %p35, %p36
    %p38 = scmp.ne.s32.totalorder %s27, %s30
    %p39 = scmp.eq.s32.totalorder %s14, 2
    %p40 = por %p38, %p39
    %p41 = scmp.ne.s32.totalorder %s30, %s31
    %p42 = scmp.eq.s32.totalorder %s14, 0
    %p43 = por %p41, %p42
    %p44 = scmp.ne.s32.totalorder %s30, %s31
    %p45 = scmp.eq.s32.totalorder %s15, 2
    %p46 = por %p44, %p45
    %p48 = scmp.ne.s32.totalorder %s31, %s47
    %p49 = scmp.eq.s32.totalorder %s15, 0
    %p50 = por %p48, %p49
    %s51 = ssub.s32 %s9, 1
    %p52 = scmp.gt.s32.totalorder %s51, 0
    %s53 = scalar_select %p52, %s51, 0
    %p54 = scmp.lt.s32.totalorder %s53, 0
    %s55 = scalar_select %p54, %s53, 0
    %s56 = ssub.s32 %s16, 1
    %p57 = scmp.gt.s32.totalorder %s56, 0
    %s58 = scalar_select %p57, %s56, 0
    %p59 = scmp.lt.s32.totalorder %s58, 0
    %s60 = scalar_select %p59, %s58, 0
    %s61 = ssub.s32 %s55, %s60
    %p62 = scmp.eq.s32.totalorder %s61, 0
    %s64 = sadd.s32 %s63, 1
    %s65 = scalar_select %p62, %s63, %s64
    %p68 = pneg %p62
    %p69 = scmp.eq.s32.totalorder %s9, 2
    %p70 = por %p68, %p69
    %p71 = scmp.ne.s32.totalorder %s63, %s66
    %p72 = scmp.eq.s32.totalorder %s9, 0
    %p73 = por %p71, %p72
    %p74 = scmp.ne.s32.totalorder %s63, %s66
    %p75 = scmp.eq.s32.totalorder %s14, 2
    %p76 = por %p74, %p75
    %p77 = scmp.ne.s32.totalorder %s66, %s67
    %p78 = scmp.eq.s32.totalorder %s14, 0
    %p79 = por %p77, %p78
    %p80 = scmp.ne.s32.totalorder %s66, %s67
    %p81 = scmp.eq.s32.totalorder %s15, 2
    %p82 = por %p80, %p81
    %p84 = scmp.ne.s32.totalorder %s67, %s83
    %p85 = scmp.eq.s32.totalorder %s15, 0
    %p86 = por %p84, %p85
    %s87 = ssub.s32 %s9, 2
    %p88 = scmp.gt.s32.totalorder %s87, 0
    %s89 = scalar_select %p88, %s87, 0
    %p90 = scmp.lt.s32.totalorder %s89, 0
    %s91 = scalar_select %p90, %s89, 0
    %s92 = ssub.s32 %s16, 2
    %p93 = scmp.gt.s32.totalorder %s92, 0
    %s94 = scalar_select %p93, %s92, 0
    %p95 = scmp.lt.s32.totalorder %s94, 0
    %s96 = scalar_select %p95, %s94, 0
    %s97 = ssub.s32 %s91, %s96
    %p98 = scmp.eq.s32.totalorder %s97, 0
    %s100 = sadd.s32 %s99, 1
    %s101 = scalar_select %p98, %s99, %s100
    %p104 = pneg %p98
    %p105 = scmp.eq.s32.totalorder %s9, 2
    %p106 = por %p104, %p105
    %p107 = scmp.ne.s32.totalorder %s99, %s102
    %p108 = scmp.eq.s32.totalorder %s9, 0
    %p109 = por %p107, %p108
    %p110 = scmp.ne.s32.totalorder %s99, %s102
    %p111 = scmp.eq.s32.totalorder %s14, 2
    %p112 = por %p110, %p111
    %p113 = scmp.ne.s32.totalorder %s102, %s103
    %p114 = scmp.eq.s32.totalorder %s14, 0
    %p115 = por %p113, %p114
    %p116 = scmp.ne.s32.totalorder %s102, %s103
    %p117 = scmp.eq.s32.totalorder %s15, 2
    %p118 = por %p116, %p117
    %p120 = scmp.ne.s32.totalorder %s103, %s119
    %p121 = scmp.eq.s32.totalorder %s15, 0
    %p122 = por %p120, %p121
    %s123 = ssub.s32 %s9, %s16
    %p124 = scmp.eq.s32.totalorder %s123, 0
    %s126 = sadd.s32 %s125, 1
    %s127 = scalar_select %p124, %s125, %s126
    %p130 = pneg %p124
    %p131 = scmp.eq.s32.totalorder %s9, 2
    %p132 = por %p130, %p131
    %p133 = scmp.ne.s32.totalorder %s125, %s128
    %p134 = scmp.eq.s32.totalorder %s9, 0
    %p135 = por %p133, %p134
    %p136 = scmp.ne.s32.totalorder %s125, %s128
    %p137 = scmp.eq.s32.totalorder %s14, 2
    %p138 = por %p136, %p137
    %p139 = scmp.ne.s32.totalorder %s128, %s129
    %p140 = scmp.eq.s32.totalorder %s14, 0
    %p141 = por %p139, %p140
    %p142 = scmp.ne.s32.totalorder %s128, %s129
    %p143 = scmp.eq.s32.totalorder %s15, 2
    %p144 = por %p142, %p143
    %p146 = scmp.ne.s32.totalorder %s129, %s145
    %p147 = scmp.eq.s32.totalorder %s15, 0
    %p148 = por %p146, %p147
    %p149 = scmp.le.s32.totalorder 1, %s9
    %p150 = scmp.lt.s32.totalorder %s9, 4
    %p151 = pnand %p149, %p150
    %p152 = pneg %p151
    // Predicated region
    $region9: #{tpu_custom_call.1} parent=5 // pred_check
      _
    $region10: #{tpu_custom_call.1} parent=5 // pred_check_branch
      %154 = sbr.rel (%p151) target = $region12
    $region11: #{tpu_custom_call.1} parent=5 // pred_region
      %s155 = ssub.s32 %s9, 1
    $region12: #{tpu_custom_call.1} parent=5 // pred_fallthru
      _
    %p156 = scmp.lt.s32.totalorder %s9, 3
    // Predicated region
    $region13: #{tpu_custom_call.1} parent=5 // pred_check
      %p157 = pneg %p156
    $region14: #{tpu_custom_call.1} parent=5 // pred_check_branch
      %159 = sbr.rel (%p157) target = $region16
    $region15: #{tpu_custom_call.1} parent=5 // pred_region
      // Predicated region
      $region17: #{tpu_custom_call.1} parent=15 // pred_check
        %p160 = pneg %p37
      $region18: #{tpu_custom_call.1} parent=15 // pred_check_branch
        %162 = sbr.rel (%p160) target = $region20
      $region19: #{tpu_custom_call.1} parent=15 // pred_region
        %p163 = scmp.gt.s32.totalorder %s9, 0
        %s164 = scalar_select %p163, %s9, 0
        %p165 = scmp.lt.s32.totalorder %s164, 0
        %s166 = scalar_select %p165, %s164, 0
        %p167 = scmp.lt.s32.totalorder %s166, 0
        %s168 = scalar_select %p167, %s166, 0
        %s169 = smul.addr %s168, 2
        %s170 = scalar_lea.vmem %s0, %s169
        %p171 = scmp.gt.s32.totalorder %s9, 0
        %s172 = scalar_select %p171, %s9, 0
        %p173 = scmp.lt.s32.totalorder %s172, 0
        %s174 = scalar_select %p173, %s172, 0
      $region20: #{tpu_custom_call.1} parent=15 // pred_fallthru
        _
      // Predicated region
      $region21: #{tpu_custom_call.1} parent=15 // pred_check
        %p175 = pneg %p73
      $region22: #{tpu_custom_call.1} parent=15 // pred_check_branch
        %177 = sbr.rel (%p175) target = $region24
      $region23: #{tpu_custom_call.1} parent=15 // pred_region
        %s178 = ssub.s32 %s9, 1
        %p179 = scmp.gt.s32.totalorder %s178, 0
        %s180 = scalar_select %p179, %s178, 0
        %p181 = scmp.lt.s32.totalorder %s180, 0
        %s182 = scalar_select %p181, %s180, 0
        %s183 = smul.u32 2, %s182
        %p184 = scmp.lt.s32.totalorder %s183, 1
        %s185 = scalar_select %p184, %s183, 1
        %s186 = smul.addr %s185, 8
        %s187 = scalar_lea.vmem %s1, %s186
        %s188 = ssub.s32 %s9, 1
        %p189 = scmp.gt.s32.totalorder %s188, 0
        %s190 = scalar_select %p189, %s188, 0
        %p191 = scmp.lt.s32.totalorder %s190, 0
        %s192 = scalar_select %p191, %s190, 0
        %s193 = smul.u32 2, %s192
      $region24: #{tpu_custom_call.1} parent=15 // pred_fallthru
        _
      // Predicated region
      $region25: #{tpu_custom_call.1} parent=15 // pred_check
        %p194 = pneg %p109
      $region26: #{tpu_custom_call.1} parent=15 // pred_check_branch
        %196 = sbr.rel (%p194) target = $region28
      $region27: #{tpu_custom_call.1} parent=15 // pred_region
        %s197 = ssub.s32 %s9, 2
        %p198 = scmp.gt.s32.totalorder %s197, 0
        %s199 = scalar_select %p198, %s197, 0
        %p200 = scmp.lt.s32.totalorder %s199, 0
        %s201 = scalar_select %p200, %s199, 0
        %s202 = smul.u32 2, %s201
        %p203 = scmp.lt.s32.totalorder %s202, 1
        %s204 = scalar_select %p203, %s202, 1
        %s205 = smul.addr %s204, 8
        %s206 = scalar_lea.vmem %s2, %s205
        %s207 = ssub.s32 %s9, 2
        %p208 = scmp.gt.s32.totalorder %s207, 0
        %s209 = scalar_select %p208, %s207, 0
        %p210 = scmp.lt.s32.totalorder %s209, 0
        %s211 = scalar_select %p210, %s209, 0
        %s212 = smul.u32 2, %s211
      $region28: #{tpu_custom_call.1} parent=15 // pred_fallthru
        _
    $region16: #{tpu_custom_call.1} parent=5 // pred_fallthru
      _
    %p213 = scmp.le.s32.totalorder 1, %s9
    %p214 = scmp.lt.s32.totalorder %s9, 4
    %p215 = pnand %p213, %p214
    %p216 = pneg %p215
    // Predicated region
    $region29: #{tpu_custom_call.1} parent=5 // pred_check
      _
    $region30: #{tpu_custom_call.1} parent=5 // pred_check_branch
      %218 = sbr.rel (%p215) target = $region32
    $region31: #{tpu_custom_call.1} parent=5 // pred_region
      %s219 = ssub.s32 %s9, 1
      %p220 = scmp.gt.s32.totalorder %s14, 0
      %s221 = scalar_select %p220, %s14, 0
      %p222 = scmp.lt.s32.totalorder %s221, 0
      %s223 = scalar_select %p222, %s221, 0
      %p224 = scmp.lt.s32.totalorder %s223, 0
      %s225 = scalar_select %p224, %s223, 0
      %s226 = smul.addr %s225, 2
      %s227 = scalar_lea.vmem %s0, %s226
      %p228 = pneg %p43
      %p229 = pneg %p40
      %s230 = ssub.s32 %s14, 1
      %p231 = scmp.gt.s32.totalorder %s230, 0
      %s232 = scalar_select %p231, %s230, 0
      %p233 = scmp.lt.s32.totalorder %s232, 0
      %s234 = scalar_select %p233, %s232, 0
      %s235 = smul.u32 2, %s234
      %p236 = scmp.lt.s32.totalorder %s235, 1
      %s237 = scalar_select %p236, %s235, 1
      %s238 = smul.addr %s237, 8
      %s239 = scalar_lea.vmem %s1, %s238
      %p240 = pneg %p79
      %p241 = pneg %p76
      %s242 = ssub.s32 %s14, 2
      %p243 = scmp.gt.s32.totalorder %s242, 0
      %s244 = scalar_select %p243, %s242, 0
      %p245 = scmp.lt.s32.totalorder %s244, 0
      %s246 = scalar_select %p245, %s244, 0
      %s247 = smul.u32 2, %s246
      %p248 = scmp.lt.s32.totalorder %s247, 1
      %s249 = scalar_select %p248, %s247, 1
      %s250 = smul.addr %s249, 8
      %s251 = scalar_lea.vmem %s2, %s250
      %p252 = pneg %p115
      %p253 = pneg %p112
      %p254 = pneg %p141
      %p255 = pneg %p138
      %p256 = scmp.lt.s32.totalorder %s14, 2
      %s257 = scalar_select %p256, %s14, 2
      %s258 = scalar_lea.vmem %s3, %s257
      %p259 = scmp.gt.s32.totalorder %s14, 0
      %s260 = scalar_select %p259, %s14, 0
      %p261 = scmp.lt.s32.totalorder %s260, 0
      %s262 = scalar_select %p261, %s260, 0
      %p263 = scmp.lt.s32.totalorder %s262, 0
      %s264 = scalar_select %p263, %s262, 0
      %s265 = smul.addr %s264, 2
      %s266 = scalar_lea.vmem %s0, %s265
      %p267 = scmp.gt.s32.totalorder %s14, 0
      %s268 = scalar_select %p267, %s14, 0
      %p269 = scmp.lt.s32.totalorder %s268, 0
      %s270 = scalar_select %p269, %s268, 0
      %s271 = ssub.s32 %s14, 1
      %p272 = scmp.gt.s32.totalorder %s271, 0
      %s273 = scalar_select %p272, %s271, 0
      %p274 = scmp.lt.s32.totalorder %s273, 0
      %s275 = scalar_select %p274, %s273, 0
      %s276 = smul.u32 2, %s275
      %p277 = scmp.lt.s32.totalorder %s276, 1
      %s278 = scalar_select %p277, %s276, 1
      %s279 = smul.addr %s278, 8
      %s280 = scalar_lea.vmem %s1, %s279
      %s281 = ssub.s32 %s14, 1
      %p282 = scmp.gt.s32.totalorder %s281, 0
      %s283 = scalar_select %p282, %s281, 0
      %p284 = scmp.lt.s32.totalorder %s283, 0
      %s285 = scalar_select %p284, %s283, 0
      %s286 = smul.u32 2, %s285
      %s287 = ssub.s32 %s14, 2
      %p288 = scmp.gt.s32.totalorder %s287, 0
      %s289 = scalar_select %p288, %s287, 0
      %p290 = scmp.lt.s32.totalorder %s289, 0
      %s291 = scalar_select %p290, %s289, 0
      %s292 = smul.u32 2, %s291
      %p293 = scmp.lt.s32.totalorder %s292, 1
      %s294 = scalar_select %p293, %s292, 1
      %s295 = smul.addr %s294, 8
      %s296 = scalar_lea.vmem %s2, %s295
      %s297 = ssub.s32 %s14, 2
      %p298 = scmp.gt.s32.totalorder %s297, 0
      %s299 = scalar_select %p298, %s297, 0
      %p300 = scmp.lt.s32.totalorder %s299, 0
      %s301 = scalar_select %p300, %s299, 0
      %s302 = smul.u32 2, %s301
      %p303 = scmp.lt.s32.totalorder %s14, 2
      %s304 = scalar_select %p303, %s14, 2
      %s305 = scalar_lea.vmem %s3, %s304
      %p306 = scmp.ge.s32.totalorder %s14, 0
      %p307 = scmp.lt.s32.totalorder %s14, 1
      %p308 = pnand %p306, %p307
      %p309 = pneg %p308
      // Predicated region
      $region33: #{tpu_custom_call.1} parent=31 // pred_check
        _
      $region34: #{tpu_custom_call.1} parent=31 // pred_check_branch
        %311 = sbr.rel (%p308) target = $region36
      $region35: #{tpu_custom_call.1} parent=31 // pred_region
        %v312 = vlaneseq
        %v313 = vshrl.u32 %v312, 7
        %s314 = smul.u32 %s14, 2
        %v315 = vstv %s314
        %v316 = vadd.s32 %v315, %v313
        %vm317 = vcmp.lt.s32.totalorder %v316, 2
        %v318 = vld [vmem:[%s266] sm:$0x3]
        %v319 = vsel %vm317, %v318, 1.0
        %v320 = vlog2.pop %v319
        %v321 = vmul.f32 %v320, 0.6931472
        %vm322 = vcmask 1041408
        %v323 = vsel %vm322, %v321, 0.0
        %324 = vadd.xlane.f32.xlu0 %v323
        %v325 = vpop.xlane.xlu0 %324
        %v326 = vrot.slane %v325, 4
        %v327 = vadd.f32 %v325, %v326
        %v328 = vrot.slane %v327, 2
        %v329 = vadd.f32 %v327, %v328
        %v330 = vrot.slane %v329, 1
        %v331 = vadd.f32 %v329, %v330
        %s332 = vtos %v331
        %v333 = vstv %s332
        %vm334 = vcmask 0
        %335 = vst.msk [vmem:[%s305] sm:$0x1] %vm334, %v333
      $region36: #{tpu_custom_call.1} parent=31 // pred_fallthru
        _
      %p336 = scmp.ge.s32.totalorder %s14, 1
      %p337 = scmp.lt.s32.totalorder %s14, 2
      %p338 = pnand %p336, %p337
      %p339 = pneg %p338
      // Predicated region
      $region37: #{tpu_custom_call.1} parent=31 // pred_check
        _
      $region38: #{tpu_custom_call.1} parent=31 // pred_check_branch
        %341 = sbr.rel (%p338) target = $region40
      $region39: #{tpu_custom_call.1} parent=31 // pred_region
        %s342 = ssub.s32 %s14, 1
        %v343 = vlaneseq
        %v344 = vshrl.u32 %v343, 7
        %v345 = vadd.s32 %v344, 8
        %s346 = smul.u32 %s342, 16
        %v347 = vstv %s346
        %v348 = vadd.s32 %v347, %v344
        %v349 = vadd.s32 %v347, %v345
        %vm350 = vcmp.lt.s32.totalorder %v348, 16
        %vm351 = vcmp.lt.s32.totalorder %v349, 16
        %v352 = vld [vmem:[%s280] sm:$0xff]
        %v353 = vld [vmem:[%s280 + $0x8] sm:$0xff]
        %v354 = vsel %vm350, %v352, 1.0
        %v355 = vsel %vm351, %v353, 1.0
        %v356 = vlog2.pop %v354
        %v357 = vmul.f32 %v356, 0.6931472
        %v358 = vlog2.pop %v355
        %v359 = vmul.f32 %v358, 0.6931472
        %vm360 = vcmask 15360
        %v361 = vsel %vm360, %v357, 0.0
        %v362 = vsel %vm360, %v359, 0.0
        %v363 = vadd.f32 %v361, %v362
        %364 = vadd.xlane.f32.xlu0 %v363
        %v365 = vpop.xlane.xlu0 %364
        %v366 = vrot.slane %v365, 4
        %v367 = vadd.f32 %v365, %v366
        %v368 = vrot.slane %v367, 2
        %v369 = vadd.f32 %v367, %v368
        %v370 = vrot.slane %v369, 1
        %v371 = vadd.f32 %v369, %v370
        %s372 = vtos %v371
        %v373 = vstv %s372
        %vm374 = vcmask 0
        %375 = vst.msk [vmem:[%s305] sm:$0x1] %vm374, %v373
      $region40: #{tpu_custom_call.1} parent=31 // pred_fallthru
        _
      %p376 = scmp.ge.s32.totalorder %s14, 2
      %p377 = scmp.lt.s32.totalorder %s14, 3
      %p378 = pnand %p376, %p377
      %p379 = pneg %p378
      // Predicated region
      $region41: #{tpu_custom_call.1} parent=31 // pred_check
        _
      $region42: #{tpu_custom_call.1} parent=31 // pred_check_branch
        %381 = sbr.rel (%p378) target = $region44
      $region43: #{tpu_custom_call.1} parent=31 // pred_region
        %s382 = ssub.s32 %s14, 2
        %v383 = vlaneseq
        %v384 = vshrl.u32 %v383, 7
        %v385 = vadd.s32 %v384, 8
        %s386 = smul.u32 %s382, 10
        %v387 = vstv %s386
        %v388 = vadd.s32 %v387, %v384
        %v389 = vadd.s32 %v387, %v385
        %vm390 = vcmp.lt.s32.totalorder %v388, 10
        %vm391 = vcmp.lt.s32.totalorder %v389, 10
        %v392 = vld [vmem:[%s296] sm:$0xff]
        %v393 = vld [vmem:[%s296 + $0x8] sm:$0x3]
        %v394 = vsel %vm390, %v392, 1.0
        %v395 = vsel %vm391, %v393, 1.0
        %v396 = vlog2.pop %v394
        %v397 = vmul.f32 %v396, 0.6931472
        %v398 = vlog2.pop %v395
        %v399 = vmul.f32 %v398, 0.6931472
        %vm400 = vcmask 1041408
        %v401 = vsel %vm400, %v399, 0.0
        %v402 = vadd.f32 %v397, %v401
        %403 = vadd.xlane.f32.xlu0 %v402
        %v404 = vpop.xlane.xlu0 %403
        %v405 = vrot.slane %v404, 4
        %v406 = vadd.f32 %v404, %v405
        %v407 = vrot.slane %v406, 2
        %v408 = vadd.f32 %v406, %v407
        %v409 = vrot.slane %v408, 1
        %v410 = vadd.f32 %v408, %v409
        %s411 = vtos %v410
        %v412 = vstv %s411
        %vm413 = vcmask 0
        %414 = vst.msk [vmem:[%s305] sm:$0x1] %vm413, %v412
      $region44: #{tpu_custom_call.1} parent=31 // pred_fallthru
        _
      %p415 = scmp.lt.s32.totalorder %s14, 2
      %s416 = scalar_select %p415, %s14, 2
      %s417 = scalar_lea.vmem %s3, %s416
      // Predicated region
      $region45: #{tpu_custom_call.1} parent=31 // pred_check
        %p418 = pneg %p138
      $region46: #{tpu_custom_call.1} parent=31 // pred_check_branch
        %420 = sbr.rel (%p418) target = $region48
      $region47: #{tpu_custom_call.1} parent=31 // pred_region
        _
      $region48: #{tpu_custom_call.1} parent=31 // pred_fallthru
        _
    $region32: #{tpu_custom_call.1} parent=5 // pred_fallthru
      _
    %p421 = scmp.le.s32.totalorder 2, %s9
    // Predicated region
    $region49: #{tpu_custom_call.1} parent=5 // pred_check
      %p422 = pneg %p421
    $region50: #{tpu_custom_call.1} parent=5 // pred_check_branch
      %424 = sbr.rel (%p422) target = $region52
    $region51: #{tpu_custom_call.1} parent=5 // pred_region
      %s425 = ssub.s32 %s9, 2
      // Predicated region
      $region53: #{tpu_custom_call.1} parent=51 // pred_check
        %p426 = pneg %p144
      $region54: #{tpu_custom_call.1} parent=51 // pred_check_branch
        %428 = sbr.rel (%p426) target = $region56
      $region55: #{tpu_custom_call.1} parent=51 // pred_region
        %p429 = scmp.lt.s32.totalorder %s15, 2
        %s430 = scalar_select %p429, %s15, 2
        %s431 = scalar_lea.vmem %s3, %s430
      $region56: #{tpu_custom_call.1} parent=51 // pred_fallthru
        _
    $region52: #{tpu_custom_call.1} parent=5 // pred_fallthru
      _
  $region6: #{tpu_custom_call.1} parent=0 // loop_footer
    %s13 = sadd.s32 1, %s9
  $region7: #{tpu_custom_call.1} parent=0 // loop_footer_branch
    %8 = sbr.rel target = $region3
  $region8: #{tpu_custom_call.1} parent=0 // loop_exit
    _

</llo_original>
